<compile_context>
chip_gen: v7x
topology: tpu7x:2x2x1
jax: 0.10.0
libtpu: 0.0.40
codegen_flags: <defaults>
</compile_context>

<pallas_src>
import functools

import jax
import jax.numpy as jnp
from jax.experimental import pallas as pl
from jax.experimental.pallas import tpu as pltpu


_VMEM_LIMIT_BYTES = 32 * 1024 * 1024  # explicit scoped-VMEM request, safe on v5e/v6e/v7x


# ---------------------------------------------------------------------------
# Base segmentation loss: mean cross-entropy over all pixels.
# ---------------------------------------------------------------------------
def _ce_tile_kernel(logits_ref, targets_ref, out_ref, *, hw_total, hw_tile):
    # logits_ref: (1, C, T) input dtype; targets_ref: (1, 1, T) int32
    # out_ref:    (1, 1, 1, 1) f32 partial sum for this (batch, pixel-tile) step.
    x = logits_ref[...].astype(jnp.float32)              # (1, C, T), classes on sublanes
    t = targets_ref[...]                                 # (1, 1, T)

    m = jnp.max(x, axis=1, keepdims=True)                # (1, 1, T)
    lse = m + jnp.log(jnp.sum(jnp.exp(x - m), axis=1, keepdims=True))

    cls = jax.lax.broadcasted_iota(jnp.int32, x.shape, 1)                 # (1, C, T)
    tgt_logit = jnp.sum(jnp.where(cls == t, x, 0.0), axis=1, keepdims=True)
    per_pixel = lse - tgt_logit                          # (1, 1, T)

    if hw_total % hw_tile != 0:
        # Ragged last pixel tile: zero out the padding columns.
        col = pl.program_id(1) * hw_tile + jax.lax.broadcasted_iota(
            jnp.int32, per_pixel.shape, 2)
        per_pixel = jnp.where(col < hw_total, per_pixel, 0.0)

    out_ref[...] = jnp.sum(per_pixel).reshape(1, 1, 1, 1)


def cross_entropy_loss(logits_nchw, targets_nhw, *, max_hw_tile=4096):
    n, c, h, w = logits_nchw.shape
    hw = h * w
    # Pure reshapes (layout-preserving): no NCHW->NHWC transpose pass over HBM.
    logits3d = logits_nchw.reshape(n, c, hw)
    targets3d = targets_nhw.reshape(n, 1, hw).astype(jnp.int32)

    t_tile = hw if hw <= max_hw_tile else max_hw_tile    # full dim, or multiple of 128
    num_tiles = pl.cdiv(hw, t_tile)

    kernel = functools.partial(_ce_tile_kernel, hw_total=hw, hw_tile=t_tile)
    partials = pl.pallas_call(
        kernel,
        out_shape=jax.ShapeDtypeStruct((n, num_tiles, 1, 1), jnp.float32),
        grid=(n, num_tiles),
        in_specs=[
            pl.BlockSpec((1, c, t_tile), lambda i, j: (i, 0, j)),
            pl.BlockSpec((1, 1, t_tile), lambda i, j: (i, 0, j)),
        ],
        out_specs=pl.BlockSpec((1, 1, 1, 1), lambda i, j: (i, j, 0, 0)),
        compiler_params=pltpu.CompilerParams(
            dimension_semantics=("parallel", "parallel"),
            vmem_limit_bytes=_VMEM_LIMIT_BYTES,
        ),
    )(logits3d, targets3d)
    return jnp.sum(partials) / (n * hw)


# ---------------------------------------------------------------------------
# Invariance term: mean over i>0 of MSE(features[0], features[i]).
# ---------------------------------------------------------------------------
def _mse_tile_kernel(*refs, rows_total, row_tile, num_features):
    # refs = (f0_ref, f1_ref, ..., f_{K-1}_ref, out_ref); each f ref is (R, 128).
    f_refs = refs[:num_features]
    out_ref = refs[num_features]

    f0 = f_refs[0][...].astype(jnp.float32)
    sq = jnp.zeros_like(f0)
    for fi_ref in f_refs[1:]:
        d = f0 - fi_ref[...].astype(jnp.float32)
        sq = sq + d * d                                   # pure elementwise (VPU)

    if rows_total % row_tile != 0:
        # Ragged last row tile: zero out padding rows.
        row = pl.program_id(0) * row_tile + jax.lax.broadcasted_iota(
            jnp.int32, sq.shape, 0)
        sq = jnp.where(row < rows_total, sq, 0.0)

    out_ref[...] = jnp.sum(sq).reshape(1, 1, 1)           # one reduce per tile


def invariance_loss(features, *, max_row_tile=2048):
    k = len(features)
    numel = features[0].size
    lane = 128

    if numel % lane != 0:
        # TODO(synk): zero-padding costs one extra copy of the features; the padding
        # contributes 0 to the squared-difference sum so the mean stays exact.
        pad = (-numel) % lane
        flats = [jnp.pad(f.reshape(-1), (0, pad)) for f in features]
    else:
        flats = [f.reshape(-1) for f in features]          # layout-preserving reshape

    rows = flats[0].size // lane
    mats = [f.reshape(rows, lane) for f in flats]

    row_tile = rows if rows <= max_row_tile else max_row_tile  # full dim, or mult of 8
    num_tiles = pl.cdiv(rows, row_tile)

    kernel = functools.partial(
        _mse_tile_kernel, rows_total=rows, row_tile=row_tile, num_features=k)
    partials = pl.pallas_call(
        kernel,
        out_shape=jax.ShapeDtypeStruct((num_tiles, 1, 1), jnp.float32),
        grid=(num_tiles,),
        in_specs=[pl.BlockSpec((row_tile, lane), lambda r: (r, 0))
                  for _ in range(k)],
        out_specs=pl.BlockSpec((1, 1, 1), lambda r: (r, 0, 0)),
        compiler_params=pltpu.CompilerParams(
            dimension_semantics=("parallel",),
            vmem_limit_bytes=_VMEM_LIMIT_BYTES,
        ),
    )(*mats)
    return jnp.sum(partials) / ((k - 1) * numel)


# ---------------------------------------------------------------------------
# FeatureInvariantLoss forward
# ---------------------------------------------------------------------------
def feature_invariant_loss(logits, targets, features=None, invariance_weight=0.1):
    seg_loss = cross_entropy_loss(logits, targets)
    if features is not None and len(features) > 1:
        inv = invariance_loss(features)
        return seg_loss + invariance_weight * inv
    return seg_loss


# ---------------------------------------------------------------------------
# Reference (pure JAX) for sanity checking
# ---------------------------------------------------------------------------
def _reference(logits, targets, features, invariance_weight=0.1):
    n, c, h, w = logits.shape
    logp = jax.nn.log_softmax(jnp.transpose(logits, (0, 2, 3, 1)), axis=-1)
    tgt = jax.nn.one_hot(targets, c)
    seg = -jnp.mean(jnp.sum(logp * tgt, axis=-1))
    inv = 0.0
    for i in range(1, len(features)):
        inv += jnp.mean((features[0] - features[i]) ** 2)
    inv /= len(features) - 1
    return seg + invariance_weight * inv


if __name__ == "__main__":
    key = jax.random.PRNGKey(0)
    k1, k2, k3, k4, k5 = jax.random.split(key, 5)

    # Small shapes: batch=2, classes=4, spatial=16x16, feature channels=8
    logits = jax.random.normal(k1, (2, 4, 16, 16), dtype=jnp.float32)
    targets = jax.random.randint(k2, (2, 16, 16), 0, 4, dtype=jnp.int32)
    features = [
        jax.random.normal(k3, (2, 8, 16, 16), dtype=jnp.float32),
        jax.random.normal(k4, (2, 8, 16, 16), dtype=jnp.float32),
        jax.random.normal(k5, (2, 8, 16, 16), dtype=jnp.float32),
    ]

    loss = feature_invariant_loss(logits, targets, features, invariance_weight=0.1)
    loss = jax.block_until_ready(loss)

    ref = _reference(logits, targets, features, invariance_weight=0.1)
    assert jnp.allclose(loss, ref, atol=1e-3, rtol=1e-3), (loss, ref)

    print("KERNEL_OK")
</pallas_src>

<mosaic_0001>
module attributes {stable_mosaic.version = 11 : i64} {
  func.func @_ce_tile_kernel(%arg0: i32, %arg1: i32, %arg2: memref<1x4x256xf32, #tpu.memory_space<vmem>>, %arg3: memref<1x1x256xi32, #tpu.memory_space<vmem>>, %arg4: memref<1x1x1x1xf32, #tpu.memory_space<vmem>>) attributes {dimension_semantics = [#tpu.dimension_semantics<parallel>, #tpu.dimension_semantics<parallel>], iteration_bounds = array<i64: 2, 1>, scalar_prefetch = 0 : i64, scratch_operands = 0 : i64, tpu.core_type = #tpu.core_type<tc>, window_params = [{transform_indices = @transform_0, window_bounds = array<i64: 1, 4, 256>}, {transform_indices = @transform_1, window_bounds = array<i64: 1, 1, 256>}, {transform_indices = @transform_2, window_bounds = array<i64: 1, 1, 1, 1>}]} {
    %c0 = arith.constant 0 : index
    %c0_0 = arith.constant 0 : index
    %c0_1 = arith.constant 0 : index
    %0 = vector.load %arg2[%c0, %c0_0, %c0_1] : memref<1x4x256xf32, #tpu.memory_space<vmem>>, vector<1x4x256xf32>
    %c0_2 = arith.constant 0 : index
    %c0_3 = arith.constant 0 : index
    %c0_4 = arith.constant 0 : index
    %1 = vector.load %arg3[%c0_2, %c0_3, %c0_4] : memref<1x1x256xi32, #tpu.memory_space<vmem>>, vector<1x1x256xi32>
    %cst = arith.constant dense<0xFF800000> : vector<1x256xf32>
    %2 = vector.multi_reduction <maximumf>, %0, %cst [1] : vector<1x4x256xf32> to vector<1x256xf32>
    %3 = vector.shape_cast %2 : vector<1x256xf32> to vector<1x1x256xf32>
    %4 = vector.broadcast %3 : vector<1x1x256xf32> to vector<1x4x256xf32>
    %5 = arith.subf %0, %4 : vector<1x4x256xf32>
    %6 = math.exp %5 : vector<1x4x256xf32>
    %cst_5 = arith.constant dense<0.000000e+00> : vector<1x256xf32>
    %7 = vector.multi_reduction <add>, %6, %cst_5 [1] : vector<1x4x256xf32> to vector<1x256xf32>
    %8 = vector.shape_cast %7 : vector<1x256xf32> to vector<1x1x256xf32>
    %9 = math.log %8 : vector<1x1x256xf32>
    %10 = arith.addf %3, %9 : vector<1x1x256xf32>
    %11 = tpu.iota {dimensions = array<i32: 1>} : vector<1x4x256xi32>
    %12 = vector.broadcast %1 : vector<1x1x256xi32> to vector<1x4x256xi32>
    %13 = arith.cmpi eq, %11, %12 : vector<1x4x256xi32>
    %cst_6 = arith.constant 0.000000e+00 : f32
    %14 = vector.broadcast %cst_6 : f32 to vector<1x4x256xf32>
    %15 = arith.select %13, %0, %14 : vector<1x4x256xi1>, vector<1x4x256xf32>
    %cst_7 = arith.constant dense<0.000000e+00> : vector<1x256xf32>
    %16 = vector.multi_reduction <add>, %15, %cst_7 [1] : vector<1x4x256xf32> to vector<1x256xf32>
    %17 = vector.shape_cast %16 : vector<1x256xf32> to vector<1x1x256xf32>
    %18 = arith.subf %10, %17 : vector<1x1x256xf32>
    %19 = vector.shape_cast %18 : vector<1x1x256xf32> to vector<1x1x1x256xf32>
    %cst_8 = arith.constant dense<0.000000e+00> : vector<1xf32>
    %20 = vector.multi_reduction <add>, %19, %cst_8 [1, 2, 3] : vector<1x1x1x256xf32> to vector<1xf32>
    %21 = vector.shape_cast %20 : vector<1xf32> to vector<1x1x1x1xf32>
    %22 = vector.extract %21[0, 0, 0, 0] : f32 from vector<1x1x1x1xf32>
    %23 = vector.broadcast %22 : f32 to vector<1x1x1x1xf32>
    %c0_9 = arith.constant 0 : index
    %c0_10 = arith.constant 0 : index
    %c0_11 = arith.constant 0 : index
    %c0_12 = arith.constant 0 : index
    %24 = vector.load %arg4[%c0_9, %c0_10, %c0_11, %c0_12] : memref<1x1x1x1xf32, #tpu.memory_space<vmem>>, vector<1x1x1x1xf32>
    tpu.vector_store %arg4[%c0_9, %c0_10, %c0_11, %c0_12], %23 {strides = array<i32>} : memref<1x1x1x1xf32, #tpu.memory_space<vmem>>, vector<1x1x1x1xf32>,
    return
  }
  func.func @transform_0(%arg0: i32, %arg1: i32) -> (i32, i32, i32) {
    %c0_i32 = arith.constant 0 : i32
    %c0_i32_0 = arith.constant 0 : i32
    return %arg0, %c0_i32, %arg1 : i32, i32, i32
  }
  func.func @transform_1(%arg0: i32, %arg1: i32) -> (i32, i32, i32) {
    %c0_i32 = arith.constant 0 : i32
    %c0_i32_0 = arith.constant 0 : i32
    return %arg0, %c0_i32, %arg1 : i32, i32, i32
  }
  func.func @transform_2(%arg0: i32, %arg1: i32) -> (i32, i32, i32, i32) {
    %c0_i32 = arith.constant 0 : i32
    %c0_i32_0 = arith.constant 0 : i32
    %c0_i32_1 = arith.constant 0 : i32
    return %arg0, %arg1, %c0_i32, %c0_i32_0 : i32, i32, i32, i32
  }
}

</mosaic_0001>

<llo_original>
// kernel: tpu_custom_call.1
$region0: #{tpu_custom_call.1}
  #allocation0 [shape = 'u32[]', space=smem, size = 0x4, offset = 0x4, fixed_abs, tag = 'smem constant byte address 0x4 - core index']
  #allocation1 [shape = 'u32[144,128]{1,0:T(1,128)}', space=vmem, size = 0x12000, scoped, tag = 'internal scratch']
  %s0 = inlined_call_operand.hbm [shape: f32[2,4,256], index: 0, kind: input, shape index: {}]
  %s1 = inlined_call_operand.hbm [shape: s32[2,1,256], index: 1, kind: input, shape index: {}]
  %s2 = inlined_call_operand.vmem [shape: f32[2,1,1,1], index: 2, kind: output, shape index: {}]
  %s3 = sld [smem:[#allocation0]]
  $region49: #{tpu_custom_call.1} parent=0
    _
  %s5 = ssub.s32 1, %s3
  %s6 = scalar_select 0, %s5, %s3
  $region1: #{tpu_custom_call.1} parent=0
    #allocation2 [shape = 'u8[8192]{0}', space=vmem, size = 0x2000, scoped, tag = 'input window, operand 0']
    #allocation3 [shape = 's32[2]{0}', space=sflag, size = 0x8, scoped, tag = 'scoped memory for tpu_custom_call.1']
    #allocation4 [shape = 'u8[2048]{0}', space=vmem, size = 0x800, scoped, tag = 'input window, operand 1']
    #allocation5 [shape = 's32[2]{0}', space=sflag, size = 0x8, scoped, tag = 'scoped memory for tpu_custom_call.1']
    %7 = vsyncpa [#allocation3], 0
    %s8 = scalar_lea.sflag [#allocation3], 1
    %9 = vsyncpa %s8, 0
    %10 = vsyncpa [#allocation5], 0
    %s11 = scalar_lea.sflag [#allocation5], 1
    %12 = vsyncpa %s11, 0
    loop: start=0, step=1, limit=4
    $region2: #{tpu_custom_call.1} parent=1 // loop_pre_header
      _
    $region3: #{tpu_custom_call.1} parent=1 // loop_header
      %s14 = sphi 0, %s18
      %p15 = scmp.ge.s32.totalorder %s14, 4
      %s21 = sphi 0, %s33
      %s22 = sphi 0, %s29
      %s23 = sphi 0, %s21
      %s24 = sphi 0, %s22
      %s25 = sphi 0, %s23
      %s26 = sphi 0, %s24
      %s38 = sphi 0, %s40
      %s41 = sphi 0, %s38
      %s42 = sphi 0, %s41
      %s58 = sphi 0, %s42
      %s66 = sphi 0, %s68
      %s69 = sphi 0, %s66
      %s70 = sphi 0, %s69
      %s86 = sphi 0, %s70
      %s94 = sphi 0, %s96
      %s97 = sphi 0, %s94
      %s98 = sphi 0, %s97
      %s114 = sphi 0, %s98
    $region4: #{tpu_custom_call.1} parent=1 // loop_header_branch
      %17 = sbr.rel (%p15) target = $region8
    $region5: #{tpu_custom_call.1} parent=1 // loop_body
      %s19 = ssub.s32 %s14, 1
      %s20 = ssub.s32 %s14, 2
      %s27 = sadd.s32 1, %s22
      %p28 = scmp.ge.s32.totalorder %s27, 1
      %s29 = scalar_select %p28, 0, %s27
      %s30 = sadd.s32 1, %s21
      %s31 = scalar_select %p28, %s30, %s21
      %p32 = scmp.ge.s32.totalorder %s31, 2
      %s33 = scalar_select %p32, 0, %s31
      %s34 = ssub.s32 %s21, %s33
      %s35 = ssub.s32 %s22, %s29
      %s36 = sor.u32 %s34, %s35
      %p37 = scmp.eq.s32.totalorder %s36, 0
      %s39 = sadd.s32 %s38, 1
      %s40 = scalar_select %p37, %s38, %s39
      %p43 = pneg %p37
      %p44 = scmp.eq.s32.totalorder %s14, 1
      %p45 = por %p43, %p44
      %p46 = scmp.ne.s32.totalorder %s38, %s41
      %p47 = scmp.eq.s32.totalorder %s14, 0
      %p48 = por %p46, %p47
      %p49 = scmp.ne.s32.totalorder %s38, %s41
      %p50 = scmp.eq.s32.totalorder %s19, 1
      %p51 = por %p49, %p50
      %p52 = scmp.ne.s32.totalorder %s41, %s42
      %p53 = scmp.eq.s32.totalorder %s19, 0
      %p54 = por %p52, %p53
      %p55 = scmp.ne.s32.totalorder %s41, %s42
      %p56 = scmp.eq.s32.totalorder %s20, 1
      %p57 = por %p55, %p56
      %p59 = scmp.ne.s32.totalorder %s42, %s58
      %p60 = scmp.eq.s32.totalorder %s20, 0
      %p61 = por %p59, %p60
      %s62 = ssub.s32 %s21, %s33
      %s63 = ssub.s32 %s22, %s29
      %s64 = sor.u32 %s62, %s63
      %p65 = scmp.eq.s32.totalorder %s64, 0
      %s67 = sadd.s32 %s66, 1
      %s68 = scalar_select %p65, %s66, %s67
      %p71 = pneg %p65
      %p72 = scmp.eq.s32.totalorder %s14, 1
      %p73 = por %p71, %p72
      %p74 = scmp.ne.s32.totalorder %s66, %s69
      %p75 = scmp.eq.s32.totalorder %s14, 0
      %p76 = por %p74, %p75
      %p77 = scmp.ne.s32.totalorder %s66, %s69
      %p78 = scmp.eq.s32.totalorder %s19, 1
      %p79 = por %p77, %p78
      %p80 = scmp.ne.s32.totalorder %s69, %s70
      %p81 = scmp.eq.s32.totalorder %s19, 0
      %p82 = por %p80, %p81
      %p83 = scmp.ne.s32.totalorder %s69, %s70
      %p84 = scmp.eq.s32.totalorder %s20, 1
      %p85 = por %p83, %p84
      %p87 = scmp.ne.s32.totalorder %s70, %s86
      %p88 = scmp.eq.s32.totalorder %s20, 0
      %p89 = por %p87, %p88
      %s90 = ssub.s32 %s21, %s33
      %s91 = ssub.s32 %s22, %s29
      %s92 = sor.u32 %s90, %s91
      %p93 = scmp.eq.s32.totalorder %s92, 0
      %s95 = sadd.s32 %s94, 1
      %s96 = scalar_select %p93, %s94, %s95
      %p99 = pneg %p93
      %p100 = scmp.eq.s32.totalorder %s14, 1
      %p101 = por %p99, %p100
      %p102 = scmp.ne.s32.totalorder %s94, %s97
      %p103 = scmp.eq.s32.totalorder %s14, 0
      %p104 = por %p102, %p103
      %p105 = scmp.ne.s32.totalorder %s94, %s97
      %p106 = scmp.eq.s32.totalorder %s19, 1
      %p107 = por %p105, %p106
      %p108 = scmp.ne.s32.totalorder %s97, %s98
      %p109 = scmp.eq.s32.totalorder %s19, 0
      %p110 = por %p108, %p109
      %p111 = scmp.ne.s32.totalorder %s97, %s98
      %p112 = scmp.eq.s32.totalorder %s20, 1
      %p113 = por %p111, %p112
      %p115 = scmp.ne.s32.totalorder %s98, %s114
      %p116 = scmp.eq.s32.totalorder %s20, 0
      %p117 = por %p115, %p116
      %p118 = scmp.le.s32.totalorder 1, %s14
      %p119 = scmp.lt.s32.totalorder %s14, 3
      %p120 = pnand %p118, %p119
      %p121 = pneg %p120
      // Predicated region
      $region9: #{tpu_custom_call.1} parent=5 // pred_check
        _
      $region10: #{tpu_custom_call.1} parent=5 // pred_check_branch
        %123 = sbr.rel (%p120) target = $region12
      $region11: #{tpu_custom_call.1} parent=5 // pred_region
        %s124 = ssub.s32 %s14, 1
      $region12: #{tpu_custom_call.1} parent=5 // pred_fallthru
        _
      %p125 = scmp.lt.s32.totalorder %s14, 2
      // Predicated region
      $region13: #{tpu_custom_call.1} parent=5 // pred_check
        %p126 = pneg %p125
      $region14: #{tpu_custom_call.1} parent=5 // pred_check_branch
        %128 = sbr.rel (%p126) target = $region16
      $region15: #{tpu_custom_call.1} parent=5 // pred_region
        // Predicated region
        $region17: #{tpu_custom_call.1} parent=15 // pred_check
          %p129 = pneg %p48
        $region18: #{tpu_custom_call.1} parent=15 // pred_check_branch
          %131 = sbr.rel (%p129) target = $region20
        $region19: #{tpu_custom_call.1} parent=15 // pred_region
          %s132 = sand.u32 %s38, 1
          %s133 = scalar_lea.sflag [#allocation3], %s132
          %s134 = sand.u32 %s38, 1
          %s135 = smul.addr %s134, 8
          %s136 = scalar_lea.vmem [#allocation2], %s135
          %s137 = smul.u32 2, %s22
          %s139 = ssub.s32 128, 128
          %140 = vsyncadd %s133, %s139
          %s141 = smul.addr %s21, 2
          %s142 = sadd.s32 %s137, %s141
          %s143 = smul.addr %s142, 64
          %s144 = scalar_lea.hbm %s0, %s143
          %s146 = sshll.u32 %s136, 4
          %s147 = int_to_ptr.vmem [resolvable:$true] %s146
          %149 = dma.hbm_to_vmem [thread:$0]  %s144, 128, %s147, %s133
        $region20: #{tpu_custom_call.1} parent=15 // pred_fallthru
          _
        // Predicated region
        $region21: #{tpu_custom_call.1} parent=15 // pred_check
          %p150 = pneg %p76
        $region22: #{tpu_custom_call.1} parent=15 // pred_check_branch
          %152 = sbr.rel (%p150) target = $region24
        $region23: #{tpu_custom_call.1} parent=15 // pred_region
          %s153 = sand.u32 %s66, 1
          %s154 = scalar_lea.sflag [#allocation5], %s153
          %s155 = sand.u32 %s66, 1
          %s156 = smul.addr %s155, 2
          %s157 = scalar_lea.vmem [#allocation4], %s156
          %s158 = smul.u32 2, %s22
          %s160 = ssub.s32 32, 32
          %161 = vsyncadd %s154, %s160
          %s162 = smul.addr %s21, 2
          %s163 = sadd.s32 %s158, %s162
          %s164 = smul.addr %s163, 16
          %s165 = scalar_lea.hbm %s1, %s164
          %s167 = sshll.u32 %s157, 4
          %s168 = int_to_ptr.vmem [resolvable:$true] %s167
          %170 = dma.hbm_to_vmem [thread:$0]  %s165, 32, %s168, %s154
        $region24: #{tpu_custom_call.1} parent=15 // pred_fallthru
          _
      $region16: #{tpu_custom_call.1} parent=5 // pred_fallthru
        _
      %p171 = scmp.le.s32.totalorder 1, %s14
      %p172 = scmp.lt.s32.totalorder %s14, 3
      %p173 = pnand %p171, %p172
      %p174 = pneg %p173
      // Predicated region
      $region25: #{tpu_custom_call.1} parent=5 // pred_check
        _
      $region26: #{tpu_custom_call.1} parent=5 // pred_check_branch
        %176 = sbr.rel (%p173) target = $region28
      $region27: #{tpu_custom_call.1} parent=5 // pred_region
        %s177 = ssub.s32 %s14, 1
        %s178 = sand.u32 %s41, 1
        %s179 = scalar_lea.sflag [#allocation3], %s178
        %s180 = sand.u32 %s41, 1
        %s181 = smul.addr %s180, 8
        %s182 = scalar_lea.vmem [#allocation2], %s181
        // Predicated region
        $region29: #{tpu_custom_call.1} parent=27 // pred_check
          %p183 = pneg %p54
        $region30: #{tpu_custom_call.1} parent=27 // pred_check_branch
          %185 = sbr.rel (%p183) target = $region32
        $region31: #{tpu_custom_call.1} parent=27 // pred_region
          %186 = dma.done %s179, 128
        $region32: #{tpu_custom_call.1} parent=27 // pred_fallthru
          _
        %s187 = sand.u32 %s69, 1
        %s188 = scalar_lea.sflag [#allocation5], %s187
        %s189 = sand.u32 %s69, 1
        %s190 = smul.addr %s189, 2
        %s191 = scalar_lea.vmem [#allocation4], %s190
        // Predicated region
        $region33: #{tpu_custom_call.1} parent=27 // pred_check
          %p192 = pneg %p82
        $region34: #{tpu_custom_call.1} parent=27 // pred_check_branch
          %194 = sbr.rel (%p192) target = $region36
        $region35: #{tpu_custom_call.1} parent=27 // pred_region
          %195 = dma.done %s188, 32
        $region36: #{tpu_custom_call.1} parent=27 // pred_fallthru
          _
        %s196 = sand.u32 %s41, 1
        %s197 = scalar_lea.sflag [#allocation3], %s196
        %s198 = sand.u32 %s41, 1
        %s199 = smul.addr %s198, 8
        %s200 = scalar_lea.vmem [#allocation2], %s199
        %p201 = pneg %p54
        %p202 = pneg %p51
        %s203 = sand.u32 %s69, 1
        %s204 = scalar_lea.sflag [#allocation5], %s203
        %s205 = sand.u32 %s69, 1
        %s206 = smul.addr %s205, 2
        %s207 = scalar_lea.vmem [#allocation4], %s206
        %p208 = pneg %p82
        %p209 = pneg %p79
        %p210 = pneg %p110
        %p211 = pneg %p107
        %p212 = scmp.lt.s32.totalorder %s23, 1
        %s213 = scalar_select %p212, %s23, 1
        %p214 = scmp.lt.s32.totalorder %s24, 0
        %s215 = scalar_select %p214, %s24, 0
        %s216 = sadd.s32 %s215, %s213
        %s217 = scalar_lea.vmem %s2, %s216
        %s218 = smul.u32 2, %s24
        %s219 = smul.u32 2, %s24
        %p220 = scmp.lt.s32.totalorder %s23, 1
        %s221 = scalar_select %p220, %s23, 1
        %p222 = scmp.lt.s32.totalorder %s24, 0
        %s223 = scalar_select %p222, %s24, 0
        %s224 = sadd.s32 %s223, %s221
        %s225 = scalar_lea.vmem %s2, %s224
        %v226 = vld [vmem:[%s182] sm:$0xff]
        %v227 = vld [vmem:[%s191] sm:$0x3]
        %v229 = vcombine.high %v226, %v226
        %vm231 = vcmask 1043456
        %v232 = vsel %vm231, %v226, -inf
        %v233 = vrot.slane %v232, 4
        %v234 = vmax.f32 %v232, %v233
        %v235 = vrot.slane %v234, 2
        %v236 = vmax.f32 %v234, %v235
        %v237 = vrot.slane %v236, 1
        %v238 = vmax.f32 %v236, %v237
        %v239 = vsel %vm231, %v229, -inf
        %v240 = vrot.slane %v239, 4
        %v241 = vmax.f32 %v239, %v240
        %v242 = vrot.slane %v241, 2
        %v243 = vmax.f32 %v241, %v242
        %v244 = vrot.slane %v243, 1
        %v245 = vmax.f32 %v243, %v244
        %v248 = vcombine.low %v238, %v245
        %v250 = vsub.f32 %v226, %v248
        %v251 = vmul.f32 %v250, 1.442695
        %v252 = vpow.pop %v251
        %v254 = vcombine.high %v252, %v252
        %v256 = vsel %vm231, %v252, 0.0
        %v257 = vrot.slane %v256, 4
        %v258 = vadd.f32 %v256, %v257
        %v259 = vrot.slane %v258, 2
        %v260 = vadd.f32 %v258, %v259
        %v261 = vrot.slane %v260, 1
        %v262 = vadd.f32 %v260, %v261
        %v263 = vsel %vm231, %v254, 0.0
        %v264 = vrot.slane %v263, 4
        %v265 = vadd.f32 %v263, %v264
        %v266 = vrot.slane %v265, 2
        %v267 = vadd.f32 %v265, %v266
        %v268 = vrot.slane %v267, 1
        %v269 = vadd.f32 %v267, %v268
        %v270 = vlog2.pop %v262
        %v271 = vmul.f32 %v270, 0.6931472
        %v272 = vlog2.pop %v269
        %v273 = vmul.f32 %v272, 0.6931472
        %v274 = vadd.f32 %v238, %v271
        %v275 = vadd.f32 %v245, %v273
        %v276 = vlaneseq
        %v277 = vshrl.u32 %v276, 7
        %v278 = vlaneseq
        %v279 = vshrl.u32 %v278, 7
        %v280 = vsub.s32 0, %v279
        %v281 = vrot.slane %v227, %v280
        %v282 = vlaneseq
        %v283 = vshrl.u32 %v282, 7
        %v284 = vsub.s32 1, %v283
        %v285 = vrot.slane %v227, %v284
        %vm286 = vcmp.eq.s32.totalorder %v277, %v281
        %vm287 = vcmp.eq.s32.totalorder %v277, %v285
        %v288 = vsel %vm286, %v226, 0.0
        %v289 = vsel %vm287, %v229, 0.0
        %v290 = vsel %vm231, %v288, 0.0
        %v291 = vrot.slane %v290, 4
        %v292 = vadd.f32 %v290, %v291
        %v293 = vrot.slane %v292, 2
        %v294 = vadd.f32 %v292, %v293
        %v295 = vrot.slane %v294, 1
        %v296 = vadd.f32 %v294, %v295
        %v297 = vsel %vm231, %v289, 0.0
        %v298 = vrot.slane %v297, 4
        %v299 = vadd.f32 %v297, %v298
        %v300 = vrot.slane %v299, 2
        %v301 = vadd.f32 %v299, %v300
        %v302 = vrot.slane %v301, 1
        %v303 = vadd.f32 %v301, %v302
        %v304 = vsub.f32 %v274, %v296
        %v305 = vsub.f32 %v275, %v303
        %vm306 = vcmask 1040384
        %v307 = vsel %vm306, %v304, 0.0
        %v308 = vsel %vm306, %v305, 0.0
        %v309 = vadd.f32 %v307, %v308
        %310 = vadd.xlane.f32.xlu0 %v309
        %v311 = vpop.xlane.xlu0 %310
        %v312 = vrot.slane %v311, 4
        %v313 = vadd.f32 %v311, %v312
        %v314 = vrot.slane %v313, 2
        %v315 = vadd.f32 %v313, %v314
        %v316 = vrot.slane %v315, 1
        %v317 = vadd.f32 %v315, %v316
        %s318 = vtos %v317
        %v319 = vstv %s318
        %vm320 = vcmask 0
        %321 = vst.msk [vmem:[%s225] sm:$0x1] %vm320, %v319
        %p322 = scmp.lt.s32.totalorder %s23, 1
        %s323 = scalar_select %p322, %s23, 1
        %p324 = scmp.lt.s32.totalorder %s24, 0
        %s325 = scalar_select %p324, %s24, 0
        %s326 = sadd.s32 %s325, %s323
        %s327 = scalar_lea.vmem %s2, %s326
        // Predicated region
        $region37: #{tpu_custom_call.1} parent=27 // pred_check
          %p328 = pneg %p107
        $region38: #{tpu_custom_call.1} parent=27 // pred_check_branch
          %330 = sbr.rel (%p328) target = $region40
        $region39: #{tpu_custom_call.1} parent=27 // pred_region
          _
        $region40: #{tpu_custom_call.1} parent=27 // pred_fallthru
          _
      $region28: #{tpu_custom_call.1} parent=5 // pred_fallthru
        _
      %p331 = scmp.le.s32.totalorder 2, %s14
      // Predicated region
      $region41: #{tpu_custom_call.1} parent=5 // pred_check
        %p332 = pneg %p331
      $region42: #{tpu_custom_call.1} parent=5 // pred_check_branch
        %334 = sbr.rel (%p332) target = $region44
      $region43: #{tpu_custom_call.1} parent=5 // pred_region
        %s335 = ssub.s32 %s14, 2
        // Predicated region
        $region45: #{tpu_custom_call.1} parent=43 // pred_check
          %p336 = pneg %p113
        $region46: #{tpu_custom_call.1} parent=43 // pred_check_branch
          %338 = sbr.rel (%p336) target = $region48
        $region47: #{tpu_custom_call.1} parent=43 // pred_region
          %p339 = scmp.lt.s32.totalorder %s25, 1
          %s340 = scalar_select %p339, %s25, 1
          %p341 = scmp.lt.s32.totalorder %s26, 0
          %s342 = scalar_select %p341, %s26, 0
          %s343 = sadd.s32 %s342, %s340
          %s344 = scalar_lea.vmem %s2, %s343
        $region48: #{tpu_custom_call.1} parent=43 // pred_fallthru
          _
      $region44: #{tpu_custom_call.1} parent=5 // pred_fallthru
        _
    $region6: #{tpu_custom_call.1} parent=1 // loop_footer
      %s18 = sadd.s32 1, %s14
    $region7: #{tpu_custom_call.1} parent=1 // loop_footer_branch
      %13 = sbr.rel target = $region3
    $region8: #{tpu_custom_call.1} parent=1 // loop_exit
      _
    %345 = vsyncpa [#allocation3], 1
    %s346 = scalar_lea.sflag [#allocation3], 1
    %347 = vsyncpa %s346, 1
    %348 = vsyncpa [#allocation5], 1
    %s349 = scalar_lea.sflag [#allocation5], 1
    %350 = vsyncpa %s349, 1

</llo_original>
